<compile_context>
chip_gen: v7x
topology: tpu7x:2x2x1
jax: 0.10.0
libtpu: 0.0.40
codegen_flags: <defaults>
</compile_context>

<pallas_src>
import jax
import jax.numpy as jnp
import numpy as np
from jax.experimental import pallas as pl
from jax.experimental.pallas import tpu as pltpu

LANE = 128     # f32 lane width
SUBLANE = 8    # f32 sublane count


def _round_up(x, m):
    return (x + m - 1) // m * m


def _frm_apply_kernel(x1_ref, x2_ref, w1a_ref, w1b_ref, b1_ref,
                      w2_ref, b2_ref, g1_ref, g2_ref, o1_ref, o2_ref):
    """Per-(batch, HW-tile) spatial re-weighting apply pass.

    w1a/w1b are per-batch 1x1-conv weights with the channel gate pre-folded in;
    g1/g2 are the (C,1) channel gates (1 + cw) needed only for the residual
    recombination  o = x * (1 + (1+cw) * (1+s)).
    """
    x1 = x1_ref[...]                                   # (C, THW), lane-dense HW
    x2 = x2_ref[...]

    # 1x1 convs == channel matmuls in (C, HW) layout; f32 MXU accumulation.
    hs = jnp.dot(w1a_ref[...], x1, preferred_element_type=jnp.float32)
    hs = hs + jnp.dot(w1b_ref[...], x2, preferred_element_type=jnp.float32)
    hs = jnp.maximum(hs + b1_ref[...], 0.0)            # (C, THW)

    # Fused spatial gate: a single (2, C) @ (C, THW) matmul yields both gates.
    s = jax.nn.sigmoid(
        jnp.dot(w2_ref[...], hs, preferred_element_type=jnp.float32)
        + b2_ref[...])                                  # (2, THW)
    s1 = s[0:1, :]
    s2 = s[1:2, :]

    g1 = g1_ref[...]                                    # (C, 1)
    g2 = g2_ref[...]

    # o = x + frm  with frm = x*g + s*(x*g)  ->  o = x * (1 + g*(1+s)).
    o1_ref[...] = x1 * (1.0 + g1 * (1.0 + s1))
    o2_ref[...] = x2 * (1.0 + g2 * (1.0 + s2))


def fuse12_frm_pallas(rgb, t, params):
    """rgb, t: (B, C, H, W) float32 (NCHW).  Returns (rgb_out, ir_out) NCHW."""
    lin1_w, lin1_b, lin2_w, lin2_b, c1_w, c1_b, c2_w, c2_b = params
    B, C, H, W = rgb.shape
    HW = H * W

    # NCHW -> (B, C, HW): pure reshape, no transpose / extra HBM round trip.
    x1 = rgb.reshape(B, C, HW).astype(jnp.float32)
    x2 = t.reshape(B, C, HW).astype(jnp.float32)

    # ---- Channel gates: global avg/max pooling + tiny MLP, hoisted to the
    # wrapper (cheap XLA reduce + (2C,2C) matmuls).  Keeps the Pallas kernel
    # tileable over HW with no serial pool->MLP->apply chain inside it.
    avg = jnp.mean(x1, axis=2) + jnp.mean(x2, axis=2)        # (B, C)
    mx = jnp.max(x1, axis=2) + jnp.max(x2, axis=2)           # (B, C)
    y = jnp.concatenate([mx, avg], axis=1)                   # (B, 2C)
    h = jax.nn.relu(y @ lin1_w.T + lin1_b)
    cw = jax.nn.sigmoid(h @ lin2_w.T + lin2_b)               # (B, 2C)
    g1 = 1.0 + cw[:, :C]                                     # (B, C)
    g2 = 1.0 + cw[:, C:]

    # ---- Fold the channel gate into the 1x1-conv weights (per batch):
    # w1a @ (g1 * x1) == (w1a * g1[None, :]) @ x1.
    w1a = c1_w[:, :C, 0, 0]                                  # (C, C)
    w1b = c1_w[:, C:, 0, 0]
    w1a_eff = w1a[None, :, :] * g1[:, None, :]               # (B, C, C)
    w1b_eff = w1b[None, :, :] * g2[:, None, :]

    # ---- Hardware-friendly padding: C -> multiple of 8 sublanes, HW ->
    # multiple of the lane-tile width (=> unmasked, lane-dense stores).
    Cp = _round_up(C, SUBLANE)

    # Widest HW tile that keeps the per-step VMEM footprint (double-buffered
    # x1/x2/o1/o2 blocks + ~3 tile-sized temporaries ~= 11 tiles) inside a
    # conservative budget valid on v5e/v6e/v7x.
    tile_budget_bytes = 28 * (1 << 20)
    max_thw = max(LANE, (tile_budget_bytes // (11 * 4 * Cp)) // LANE * LANE)
    thw = int(min(2048, max_thw, _round_up(HW, LANE)))
    HWp = _round_up(HW, thw)
    n_hw_tiles = HWp // thw

    def pad_to(a, shape):
        pads = [(0, sh - s) for s, sh in zip(a.shape, shape)]
        if all(p == (0, 0) for p in pads):
            return a
        return jnp.pad(a, pads)

    x1p = pad_to(x1, (B, Cp, HWp))
    x2p = pad_to(x2, (B, Cp, HWp))
    w1a_p = pad_to(w1a_eff, (B, Cp, Cp))
    w1b_p = pad_to(w1b_eff, (B, Cp, Cp))
    b1_p = pad_to(c1_b.reshape(C, 1), (Cp, 1))
    w2_p = pad_to(c2_w[:, :, 0, 0], (2, Cp))
    b2_p = c2_b.reshape(2, 1)
    g1_p = pad_to(g1.reshape(B, C, 1), (B, Cp, 1))
    g2_p = pad_to(g2.reshape(B, C, 1), (B, Cp, 1))

    # ---- Grid over (batch, HW tile); every step is independent -> both axes
    # "parallel" (shards across TensorCores on v7x even for B == 1).
    x_spec = pl.BlockSpec((None, Cp, thw), lambda b, s: (b, 0, s))
    wbatch_spec = pl.BlockSpec((None, Cp, Cp), lambda b, s: (b, 0, 0))
    gate_spec = pl.BlockSpec((None, Cp, 1), lambda b, s: (b, 0, 0))

    def const_spec(a):
        # Constant weights/biases; index map never changes so they are fetched
        # once.  (Could be pinned to single-buffering; kept default for safety.)
        return pl.BlockSpec(a.shape, lambda b, s: (0,) * a.ndim)

    # Explicit VMEM limit sized from the real per-step footprint + headroom.
    tile_bytes = 4 * Cp * thw
    small_bytes = 2 * 2 * (4 * Cp * Cp) + 8 * (4 * Cp * LANE)
    est_bytes = int(11 * tile_bytes * 1.25 + small_bytes + (2 << 20))
    vmem_limit = int(min(max(est_bytes, 32 << 20), 60 << 20))

    # Advisory cost model: memory-bound kernel (arithmetic intensity ~ C/4).
    flops = int(B * HWp * (4 * Cp * Cp + 4 * Cp + 10 * Cp))
    transcendentals = int(B * 2 * HWp)
    bytes_accessed = int(4 * (4 * B * Cp * HWp + 2 * B * Cp * Cp))
    cost = pl.CostEstimate(flops=flops, transcendentals=transcendentals,
                           bytes_accessed=bytes_accessed)

    o1p, o2p = pl.pallas_call(
        _frm_apply_kernel,
        out_shape=(jax.ShapeDtypeStruct((B, Cp, HWp), jnp.float32),
                   jax.ShapeDtypeStruct((B, Cp, HWp), jnp.float32)),
        grid=(B, n_hw_tiles),
        in_specs=[x_spec, x_spec, wbatch_spec, wbatch_spec,
                  const_spec(b1_p), const_spec(w2_p), const_spec(b2_p),
                  gate_spec, gate_spec],
        out_specs=(x_spec, x_spec),
        compiler_params=pltpu.CompilerParams(
            dimension_semantics=("parallel", "parallel"),
            vmem_limit_bytes=vmem_limit),
        cost_estimate=cost,
    )(x1p, x2p, w1a_p, w1b_p, b1_p, w2_p, b2_p, g1_p, g2_p)

    # Strip padding; (B, C, HW) -> NCHW is a pure reshape.
    o1 = o1p[:, :C, :HW].reshape(B, C, H, W)
    o2 = o2p[:, :C, :HW].reshape(B, C, H, W)
    return o1, o2


# ----------------------------- pure-JAX reference ---------------------------
def _cemfrm_ref(rgb, t, params):
    lin1_w, lin1_b, lin2_w, lin2_b, c1_w, c1_b, c2_w, c2_b = params
    B, C, H, W = rgb.shape
    x1, x2 = rgb, t
    avg = x1.mean(axis=(2, 3)) + x2.mean(axis=(2, 3))
    mx = x1.max(axis=(2, 3)) + x2.max(axis=(2, 3))
    y = jnp.concatenate([mx, avg], axis=1)
    h = jax.nn.relu(y @ lin1_w.T + lin1_b)
    y = jax.nn.sigmoid(h @ lin2_w.T + lin2_b)              # (B, 2C)
    cw1 = y[:, :C].reshape(B, C, 1, 1)
    cw2 = y[:, C:].reshape(B, C, 1, 1)
    x1 = x1 + cw1 * x1
    x2 = x2 + cw2 * x2
    xcat = jnp.concatenate([x1, x2], axis=1)
    hs = jax.nn.relu(jnp.einsum('bchw,oc->bohw', xcat, c1_w[:, :, 0, 0])
                     + c1_b.reshape(1, -1, 1, 1))
    sw = jax.nn.sigmoid(jnp.einsum('bchw,oc->bohw', hs, c2_w[:, :, 0, 0])
                        + c2_b.reshape(1, -1, 1, 1))
    frm1 = x1 + sw[:, 0:1] * x1
    frm2 = x2 + sw[:, 1:2] * x2
    # CEM1 identity passthrough (matching the kernel's TODO).
    return rgb + frm1, t + frm2


if __name__ == "__main__":
    B, C, H, W = 2, 4, 16, 16
    key = jax.random.PRNGKey(0)
    ks = jax.random.split(key, 10)

    # Deterministic synthetic parameters (shapes per FRM(dim=C, reduction=1)).
    params = (
        0.02 * jax.random.normal(ks[0], (2 * C, 2 * C), jnp.float32),    # lin1 w
        0.01 * jax.random.normal(ks[1], (2 * C,), jnp.float32),          # lin1 b
        0.02 * jax.random.normal(ks[2], (2 * C, 2 * C), jnp.float32),    # lin2 w
        0.01 * jax.random.normal(ks[3], (2 * C,), jnp.float32),          # lin2 b
        0.10 * jax.random.normal(ks[4], (C, 2 * C, 1, 1), jnp.float32),  # conv1 w
        0.01 * jax.random.normal(ks[5], (C,), jnp.float32),              # conv1 b
        0.10 * jax.random.normal(ks[6], (2, C, 1, 1), jnp.float32),      # conv2 w
        0.01 * jax.random.normal(ks[7], (2,), jnp.float32),              # conv2 b
    )

    rgb = jax.random.normal(ks[8], (B, C, H, W), jnp.float32)
    t = jax.random.normal(ks[9], (B, C, H, W), jnp.float32)

    fused = jax.jit(fuse12_frm_pallas)
    rgb_out, ir_out = fused(rgb, t, params)
    jax.block_until_ready((rgb_out, ir_out))

    rgb_ref, ir_ref = _cemfrm_ref(rgb, t, params)
    np.testing.assert_allclose(np.asarray(rgb_out), np.asarray(rgb_ref),
                               rtol=1e-5, atol=1e-5)
    np.testing.assert_allclose(np.asarray(ir_out), np.asarray(ir_ref),
                               rtol=1e-5, atol=1e-5)
    print("KERNEL_OK")
</pallas_src>

<mosaic_0001>
module attributes {stable_mosaic.version = 11 : i64} {
  func.func @_frm_apply_kernel(%arg0: i32, %arg1: i32, %arg2: memref<1x8x256xf32, #tpu.memory_space<vmem>>, %arg3: memref<1x8x256xf32, #tpu.memory_space<vmem>>, %arg4: memref<1x8x8xf32, #tpu.memory_space<vmem>>, %arg5: memref<1x8x8xf32, #tpu.memory_space<vmem>>, %arg6: memref<8x1xf32, #tpu.memory_space<vmem>>, %arg7: memref<2x8xf32, #tpu.memory_space<vmem>>, %arg8: memref<2x1xf32, #tpu.memory_space<vmem>>, %arg9: memref<1x8x1xf32, #tpu.memory_space<vmem>>, %arg10: memref<1x8x1xf32, #tpu.memory_space<vmem>>, %arg11: memref<1x8x256xf32, #tpu.memory_space<vmem>>, %arg12: memref<1x8x256xf32, #tpu.memory_space<vmem>>) attributes {dimension_semantics = [#tpu.dimension_semantics<parallel>, #tpu.dimension_semantics<parallel>], iteration_bounds = array<i64: 2, 1>, scalar_prefetch = 0 : i64, scratch_operands = 0 : i64, tpu.core_type = #tpu.core_type<tc>, window_params = [{transform_indices = @transform_0, window_bounds = array<i64: 1, 8, 256>}, {transform_indices = @transform_1, window_bounds = array<i64: 1, 8, 256>}, {transform_indices = @transform_2, window_bounds = array<i64: 1, 8, 8>}, {transform_indices = @transform_3, window_bounds = array<i64: 1, 8, 8>}, {pipeline_mode = #tpu.pipeline_mode<synchronous>, transform_indices = @transform_4, window_bounds = array<i64: 8, 1>}, {pipeline_mode = #tpu.pipeline_mode<synchronous>, transform_indices = @transform_5, window_bounds = array<i64: 2, 8>}, {pipeline_mode = #tpu.pipeline_mode<synchronous>, transform_indices = @transform_6, window_bounds = array<i64: 2, 1>}, {transform_indices = @transform_7, window_bounds = array<i64: 1, 8, 1>}, {transform_indices = @transform_8, window_bounds = array<i64: 1, 8, 1>}, {transform_indices = @transform_9, window_bounds = array<i64: 1, 8, 256>}, {transform_indices = @transform_10, window_bounds = array<i64: 1, 8, 256>}]} {
    %c0 = arith.constant 0 : index
    %c0_0 = arith.constant 0 : index
    %c0_1 = arith.constant 0 : index
    %0 = vector.load %arg2[%c0, %c0_0, %c0_1] : memref<1x8x256xf32, #tpu.memory_space<vmem>>, vector<1x8x256xf32>
    %1 = vector.shape_cast %0 : vector<1x8x256xf32> to vector<8x256xf32>
    %c0_2 = arith.constant 0 : index
    %c0_3 = arith.constant 0 : index
    %c0_4 = arith.constant 0 : index
    %2 = vector.load %arg3[%c0_2, %c0_3, %c0_4] : memref<1x8x256xf32, #tpu.memory_space<vmem>>, vector<1x8x256xf32>
    %3 = vector.shape_cast %2 : vector<1x8x256xf32> to vector<8x256xf32>
    %c0_5 = arith.constant 0 : index
    %c0_6 = arith.constant 0 : index
    %c0_7 = arith.constant 0 : index
    %4 = vector.load %arg4[%c0_5, %c0_6, %c0_7] : memref<1x8x8xf32, #tpu.memory_space<vmem>>, vector<1x8x8xf32>
    %5 = vector.shape_cast %4 : vector<1x8x8xf32> to vector<8x8xf32>
    %cst = arith.constant dense<0.000000e+00> : vector<8x256xf32>
    %6 = tpu.matmul %5, %1, %cst {dimension_numbers = #tpu.dot_dimension_numbers<[1], [0], [0], [1], [0, 0, 1, 1], [], []>} : vector<8x8xf32>, vector<8x256xf32>, vector<8x256xf32> -> vector<8x256xf32>
    %c0_8 = arith.constant 0 : index
    %c0_9 = arith.constant 0 : index
    %c0_10 = arith.constant 0 : index
    %7 = vector.load %arg5[%c0_8, %c0_9, %c0_10] : memref<1x8x8xf32, #tpu.memory_space<vmem>>, vector<1x8x8xf32>
    %8 = vector.shape_cast %7 : vector<1x8x8xf32> to vector<8x8xf32>
    %cst_11 = arith.constant dense<0.000000e+00> : vector<8x256xf32>
    %9 = tpu.matmul %8, %3, %cst_11 {dimension_numbers = #tpu.dot_dimension_numbers<[1], [0], [0], [1], [0, 0, 1, 1], [], []>} : vector<8x8xf32>, vector<8x256xf32>, vector<8x256xf32> -> vector<8x256xf32>
    %10 = arith.addf %6, %9 : vector<8x256xf32>
    %c0_12 = arith.constant 0 : index
    %c0_13 = arith.constant 0 : index
    %11 = vector.load %arg6[%c0_12, %c0_13] : memref<8x1xf32, #tpu.memory_space<vmem>>, vector<8x1xf32>
    %12 = vector.broadcast %11 : vector<8x1xf32> to vector<8x256xf32>
    %13 = arith.addf %10, %12 : vector<8x256xf32>
    %cst_14 = arith.constant 0.000000e+00 : f32
    %14 = vector.broadcast %cst_14 : f32 to vector<8x256xf32>
    %15 = arith.maximumf %13, %14 : vector<8x256xf32>
    %c0_15 = arith.constant 0 : index
    %c0_16 = arith.constant 0 : index
    %16 = vector.load %arg7[%c0_15, %c0_16] : memref<2x8xf32, #tpu.memory_space<vmem>>, vector<2x8xf32>
    %cst_17 = arith.constant dense<0.000000e+00> : vector<2x256xf32>
    %17 = tpu.matmul %16, %15, %cst_17 {dimension_numbers = #tpu.dot_dimension_numbers<[1], [0], [0], [1], [0, 0, 1, 1], [], []>} : vector<2x8xf32>, vector<8x256xf32>, vector<2x256xf32> -> vector<2x256xf32>
    %c0_18 = arith.constant 0 : index
    %c0_19 = arith.constant 0 : index
    %18 = vector.load %arg8[%c0_18, %c0_19] : memref<2x1xf32, #tpu.memory_space<vmem>>, vector<2x1xf32>
    %19 = vector.broadcast %18 : vector<2x1xf32> to vector<2x256xf32>
    %20 = arith.addf %17, %19 : vector<2x256xf32>
    %21 = arith.negf %20 : vector<2x256xf32>
    %22 = math.exp %21 : vector<2x256xf32>
    %cst_20 = arith.constant 1.000000e+00 : f32
    %23 = vector.broadcast %cst_20 : f32 to vector<2x256xf32>
    %24 = arith.addf %23, %22 : vector<2x256xf32>
    %25 = arith.divf %23, %24 : vector<2x256xf32>
    %26 = vector.extract_strided_slice %25 {offsets = [0, 0], sizes = [1, 256], strides = [1, 1]} : vector<2x256xf32> to vector<1x256xf32>
    %27 = vector.extract_strided_slice %25 {offsets = [1, 0], sizes = [1, 256], strides = [1, 1]} : vector<2x256xf32> to vector<1x256xf32>
    %c0_21 = arith.constant 0 : index
    %c0_22 = arith.constant 0 : index
    %c0_23 = arith.constant 0 : index
    %28 = vector.load %arg9[%c0_21, %c0_22, %c0_23] : memref<1x8x1xf32, #tpu.memory_space<vmem>>, vector<1x8x1xf32>
    %29 = vector.shape_cast %28 : vector<1x8x1xf32> to vector<8x1xf32>
    %c0_24 = arith.constant 0 : index
    %c0_25 = arith.constant 0 : index
    %c0_26 = arith.constant 0 : index
    %30 = vector.load %arg10[%c0_24, %c0_25, %c0_26] : memref<1x8x1xf32, #tpu.memory_space<vmem>>, vector<1x8x1xf32>
    %31 = vector.shape_cast %30 : vector<1x8x1xf32> to vector<8x1xf32>
    %cst_27 = arith.constant 1.000000e+00 : f32
    %32 = vector.broadcast %cst_27 : f32 to vector<1x256xf32>
    %33 = arith.addf %32, %26 : vector<1x256xf32>
    %34 = vector.broadcast %29 : vector<8x1xf32> to vector<8x256xf32>
    %35 = vector.broadcast %33 : vector<1x256xf32> to vector<8x256xf32>
    %36 = arith.mulf %34, %35 : vector<8x256xf32>
    %cst_28 = arith.constant 1.000000e+00 : f32
    %37 = vector.broadcast %cst_28 : f32 to vector<8x256xf32>
    %38 = arith.addf %37, %36 : vector<8x256xf32>
    %39 = arith.mulf %1, %38 : vector<8x256xf32>
    %c0_29 = arith.constant 0 : index
    %c0_30 = arith.constant 0 : index
    %c0_31 = arith.constant 0 : index
    %40 = vector.load %arg11[%c0_29, %c0_30, %c0_31] : memref<1x8x256xf32, #tpu.memory_space<vmem>>, vector<1x8x256xf32>
    %41 = vector.shape_cast %40 : vector<1x8x256xf32> to vector<8x256xf32>
    %42 = vector.shape_cast %39 : vector<8x256xf32> to vector<1x8x256xf32>
    tpu.vector_store %arg11[%c0_29, %c0_30, %c0_31], %42 {strides = array<i32>} : memref<1x8x256xf32, #tpu.memory_space<vmem>>, vector<1x8x256xf32>,
    %cst_32 = arith.constant 1.000000e+00 : f32
    %43 = vector.broadcast %cst_32 : f32 to vector<1x256xf32>
    %44 = arith.addf %43, %27 : vector<1x256xf32>
    %45 = vector.broadcast %31 : vector<8x1xf32> to vector<8x256xf32>
    %46 = vector.broadcast %44 : vector<1x256xf32> to vector<8x256xf32>
    %47 = arith.mulf %45, %46 : vector<8x256xf32>
    %cst_33 = arith.constant 1.000000e+00 : f32
    %48 = vector.broadcast %cst_33 : f32 to vector<8x256xf32>
    %49 = arith.addf %48, %47 : vector<8x256xf32>
    %50 = arith.mulf %3, %49 : vector<8x256xf32>
    %c0_34 = arith.constant 0 : index
    %c0_35 = arith.constant 0 : index
    %c0_36 = arith.constant 0 : index
    %51 = vector.load %arg12[%c0_34, %c0_35, %c0_36] : memref<1x8x256xf32, #tpu.memory_space<vmem>>, vector<1x8x256xf32>
    %52 = vector.shape_cast %51 : vector<1x8x256xf32> to vector<8x256xf32>
    %53 = vector.shape_cast %50 : vector<8x256xf32> to vector<1x8x256xf32>
    tpu.vector_store %arg12[%c0_34, %c0_35, %c0_36], %53 {strides = array<i32>} : memref<1x8x256xf32, #tpu.memory_space<vmem>>, vector<1x8x256xf32>,
    return
  }
  func.func @transform_0(%arg0: i32, %arg1: i32) -> (i32, i32, i32) {
    %c0_i32 = arith.constant 0 : i32
    %c0_i32_0 = arith.constant 0 : i32
    return %arg0, %c0_i32, %arg1 : i32, i32, i32
  }
  func.func @transform_1(%arg0: i32, %arg1: i32) -> (i32, i32, i32) {
    %c0_i32 = arith.constant 0 : i32
    %c0_i32_0 = arith.constant 0 : i32
    return %arg0, %c0_i32, %arg1 : i32, i32, i32
  }
  func.func @transform_2(%arg0: i32, %arg1: i32) -> (i32, i32, i32) {
    %c0_i32 = arith.constant 0 : i32
    %c0_i32_0 = arith.constant 0 : i32
    %c0_i32_1 = arith.constant 0 : i32
    return %arg0, %c0_i32, %c0_i32_0 : i32, i32, i32
  }
  func.func @transform_3(%arg0: i32, %arg1: i32) -> (i32, i32, i32) {
    %c0_i32 = arith.constant 0 : i32
    %c0_i32_0 = arith.constant 0 : i32
    %c0_i32_1 = arith.constant 0 : i32
    return %arg0, %c0_i32, %c0_i32_0 : i32, i32, i32
  }
  func.func @transform_4(%arg0: i32, %arg1: i32) -> (i32, i32) {
    %c0_i32 = arith.constant 0 : i32
    %c0_i32_0 = arith.constant 0 : i32
    %c0_i32_1 = arith.constant 0 : i32
    return %c0_i32, %c0_i32_0 : i32, i32
  }
  func.func @transform_5(%arg0: i32, %arg1: i32) -> (i32, i32) {
    %c0_i32 = arith.constant 0 : i32
    %c0_i32_0 = arith.constant 0 : i32
    %c0_i32_1 = arith.constant 0 : i32
    return %c0_i32, %c0_i32_0 : i32, i32
  }
  func.func @transform_6(%arg0: i32, %arg1: i32) -> (i32, i32) {
    %c0_i32 = arith.constant 0 : i32
    %c0_i32_0 = arith.constant 0 : i32
    %c0_i32_1 = arith.constant 0 : i32
    return %c0_i32, %c0_i32_0 : i32, i32
  }
  func.func @transform_7(%arg0: i32, %arg1: i32) -> (i32, i32, i32) {
    %c0_i32 = arith.constant 0 : i32
    %c0_i32_0 = arith.constant 0 : i32
    %c0_i32_1 = arith.constant 0 : i32
    return %arg0, %c0_i32, %c0_i32_0 : i32, i32, i32
  }
  func.func @transform_8(%arg0: i32, %arg1: i32) -> (i32, i32, i32) {
    %c0_i32 = arith.constant 0 : i32
    %c0_i32_0 = arith.constant 0 : i32
    %c0_i32_1 = arith.constant 0 : i32
    return %arg0, %c0_i32, %c0_i32_0 : i32, i32, i32
  }
  func.func @transform_9(%arg0: i32, %arg1: i32) -> (i32, i32, i32) {
    %c0_i32 = arith.constant 0 : i32
    %c0_i32_0 = arith.constant 0 : i32
    return %arg0, %c0_i32, %arg1 : i32, i32, i32
  }
  func.func @transform_10(%arg0: i32, %arg1: i32) -> (i32, i32, i32) {
    %c0_i32 = arith.constant 0 : i32
    %c0_i32_0 = arith.constant 0 : i32
    return %arg0, %c0_i32, %arg1 : i32, i32, i32
  }
}

</mosaic_0001>

<llo_original>
// kernel: fuse12_frm_pallas.1
$region0: #{fuse12_frm_pallas.1}
  #allocation0 [shape = 'u32[]', space=smem, size = 0x4, offset = 0x4, fixed_abs, tag = 'smem constant byte address 0x4 - core index']
  #allocation1 [shape = 'u32[144,128]{1,0:T(1,128)}', space=vmem, size = 0x12000, scoped, tag = 'internal scratch']
  %s0 = inlined_call_operand.vmem [shape: f32[2,8,256], index: 0, kind: input, shape index: {}]
  %s1 = inlined_call_operand.vmem [shape: f32[2,8,256], index: 1, kind: input, shape index: {}]
  %s2 = inlined_call_operand.vmem [shape: f32[2,8,8], index: 2, kind: input, shape index: {}]
  %s3 = inlined_call_operand.vmem [shape: f32[2,8,8], index: 3, kind: input, shape index: {}]
  %s4 = inlined_call_operand.vmem [shape: f32[8,1], index: 4, kind: input, shape index: {}]
  %s5 = inlined_call_operand.vmem [shape: f32[2,8], index: 5, kind: input, shape index: {}]
  %s6 = inlined_call_operand.vmem [shape: f32[2,1], index: 6, kind: input, shape index: {}]
  %s7 = inlined_call_operand.vmem [shape: f32[2,8,1], index: 7, kind: input, shape index: {}]
  %s8 = inlined_call_operand.vmem [shape: f32[2,8,1], index: 8, kind: input, shape index: {}]
  %s9 = inlined_call_operand.vmem [shape: f32[2,8,256], index: 9, kind: output, shape index: {0}]
  %s10 = inlined_call_operand.vmem [shape: f32[2,8,256], index: 10, kind: output, shape index: {1}]
  %11 = xla_tuple %s9, %s10
  %s12 = sld [smem:[#allocation0]]
  $region77: #{fuse12_frm_pallas.1} parent=0
    _
  %s14 = ssub.s32 1, %s12
  %s15 = scalar_select 0, %s14, %s12
  loop: start=0, step=1, limit=4
  $region2: #{fuse12_frm_pallas.1} parent=0 // loop_pre_header
    _
  $region3: #{fuse12_frm_pallas.1} parent=0 // loop_header
    %s17 = sphi 0, %s21
    %p18 = scmp.ge.s32.totalorder %s17, 4
    %s24 = sphi 0, %s36
    %s25 = sphi 0, %s32
    %s26 = sphi 0, %s24
    %s27 = sphi 0, %s25
    %s28 = sphi 0, %s26
    %s29 = sphi 0, %s27
    %s41 = sphi 0, %s43
    %s44 = sphi 0, %s41
    %s45 = sphi 0, %s44
    %s61 = sphi 0, %s45
    %s69 = sphi 0, %s71
    %s72 = sphi 0, %s69
    %s73 = sphi 0, %s72
    %s89 = sphi 0, %s73
    %s95 = sphi 0, %s97
    %s98 = sphi 0, %s95
    %s99 = sphi 0, %s98
    %s115 = sphi 0, %s99
    %s121 = sphi 0, %s123
    %s124 = sphi 0, %s121
    %s125 = sphi 0, %s124
    %s141 = sphi 0, %s125
    %s145 = sphi 0, %s145
    %s147 = sphi 0, %s145
    %s148 = sphi 0, %s147
    %s162 = sphi 0, %s148
    %s166 = sphi 0, %s166
    %s168 = sphi 0, %s166
    %s169 = sphi 0, %s168
    %s183 = sphi 0, %s169
    %s187 = sphi 0, %s187
    %s189 = sphi 0, %s187
    %s190 = sphi 0, %s189
    %s204 = sphi 0, %s190
    %s210 = sphi 0, %s212
    %s213 = sphi 0, %s210
    %s214 = sphi 0, %s213
    %s230 = sphi 0, %s214
    %s236 = sphi 0, %s238
    %s239 = sphi 0, %s236
    %s240 = sphi 0, %s239
    %s256 = sphi 0, %s240
    %s264 = sphi 0, %s266
    %s267 = sphi 0, %s264
    %s268 = sphi 0, %s267
    %s284 = sphi 0, %s268
    %s292 = sphi 0, %s294
    %s295 = sphi 0, %s292
    %s296 = sphi 0, %s295
    %s312 = sphi 0, %s296
  $region4: #{fuse12_frm_pallas.1} parent=0 // loop_header_branch
    %20 = sbr.rel (%p18) target = $region8
  $region5: #{fuse12_frm_pallas.1} parent=0 // loop_body
    %s22 = ssub.s32 %s17, 1
    %s23 = ssub.s32 %s17, 2
    %s30 = sadd.s32 1, %s25
    %p31 = scmp.ge.s32.totalorder %s30, 1
    %s32 = scalar_select %p31, 0, %s30
    %s33 = sadd.s32 1, %s24
    %s34 = scalar_select %p31, %s33, %s24
    %p35 = scmp.ge.s32.totalorder %s34, 2
    %s36 = scalar_select %p35, 0, %s34
    %s37 = ssub.s32 %s24, %s36
    %s38 = ssub.s32 %s25, %s32
    %s39 = sor.u32 %s37, %s38
    %p40 = scmp.eq.s32.totalorder %s39, 0
    %s42 = sadd.s32 %s41, 1
    %s43 = scalar_select %p40, %s41, %s42
    %p46 = pneg %p40
    %p47 = scmp.eq.s32.totalorder %s17, 1
    %p48 = por %p46, %p47
    %p49 = scmp.ne.s32.totalorder %s41, %s44
    %p50 = scmp.eq.s32.totalorder %s17, 0
    %p51 = por %p49, %p50
    %p52 = scmp.ne.s32.totalorder %s41, %s44
    %p53 = scmp.eq.s32.totalorder %s22, 1
    %p54 = por %p52, %p53
    %p55 = scmp.ne.s32.totalorder %s44, %s45
    %p56 = scmp.eq.s32.totalorder %s22, 0
    %p57 = por %p55, %p56
    %p58 = scmp.ne.s32.totalorder %s44, %s45
    %p59 = scmp.eq.s32.totalorder %s23, 1
    %p60 = por %p58, %p59
    %p62 = scmp.ne.s32.totalorder %s45, %s61
    %p63 = scmp.eq.s32.totalorder %s23, 0
    %p64 = por %p62, %p63
    %s65 = ssub.s32 %s24, %s36
    %s66 = ssub.s32 %s25, %s32
    %s67 = sor.u32 %s65, %s66
    %p68 = scmp.eq.s32.totalorder %s67, 0
    %s70 = sadd.s32 %s69, 1
    %s71 = scalar_select %p68, %s69, %s70
    %p74 = pneg %p68
    %p75 = scmp.eq.s32.totalorder %s17, 1
    %p76 = por %p74, %p75
    %p77 = scmp.ne.s32.totalorder %s69, %s72
    %p78 = scmp.eq.s32.totalorder %s17, 0
    %p79 = por %p77, %p78
    %p80 = scmp.ne.s32.totalorder %s69, %s72
    %p81 = scmp.eq.s32.totalorder %s22, 1
    %p82 = por %p80, %p81
    %p83 = scmp.ne.s32.totalorder %s72, %s73
    %p84 = scmp.eq.s32.totalorder %s22, 0
    %p85 = por %p83, %p84
    %p86 = scmp.ne.s32.totalorder %s72, %s73
    %p87 = scmp.eq.s32.totalorder %s23, 1
    %p88 = por %p86, %p87
    %p90 = scmp.ne.s32.totalorder %s73, %s89
    %p91 = scmp.eq.s32.totalorder %s23, 0
    %p92 = por %p90, %p91
    %s93 = ssub.s32 %s24, %s36
    %p94 = scmp.eq.s32.totalorder %s93, 0
    %s96 = sadd.s32 %s95, 1
    %s97 = scalar_select %p94, %s95, %s96
    %p100 = pneg %p94
    %p101 = scmp.eq.s32.totalorder %s17, 1
    %p102 = por %p100, %p101
    %p103 = scmp.ne.s32.totalorder %s95, %s98
    %p104 = scmp.eq.s32.totalorder %s17, 0
    %p105 = por %p103, %p104
    %p106 = scmp.ne.s32.totalorder %s95, %s98
    %p107 = scmp.eq.s32.totalorder %s22, 1
    %p108 = por %p106, %p107
    %p109 = scmp.ne.s32.totalorder %s98, %s99
    %p110 = scmp.eq.s32.totalorder %s22, 0
    %p111 = por %p109, %p110
    %p112 = scmp.ne.s32.totalorder %s98, %s99
    %p113 = scmp.eq.s32.totalorder %s23, 1
    %p114 = por %p112, %p113
    %p116 = scmp.ne.s32.totalorder %s99, %s115
    %p117 = scmp.eq.s32.totalorder %s23, 0
    %p118 = por %p116, %p117
    %s119 = ssub.s32 %s24, %s36
    %p120 = scmp.eq.s32.totalorder %s119, 0
    %s122 = sadd.s32 %s121, 1
    %s123 = scalar_select %p120, %s121, %s122
    %p126 = pneg %p120
    %p127 = scmp.eq.s32.totalorder %s17, 1
    %p128 = por %p126, %p127
    %p129 = scmp.ne.s32.totalorder %s121, %s124
    %p130 = scmp.eq.s32.totalorder %s17, 0
    %p131 = por %p129, %p130
    %p132 = scmp.ne.s32.totalorder %s121, %s124
    %p133 = scmp.eq.s32.totalorder %s22, 1
    %p134 = por %p132, %p133
    %p135 = scmp.ne.s32.totalorder %s124, %s125
    %p136 = scmp.eq.s32.totalorder %s22, 0
    %p137 = por %p135, %p136
    %p138 = scmp.ne.s32.totalorder %s124, %s125
    %p139 = scmp.eq.s32.totalorder %s23, 1
    %p140 = por %p138, %p139
    %p142 = scmp.ne.s32.totalorder %s125, %s141
    %p143 = scmp.eq.s32.totalorder %s23, 0
    %p144 = por %p142, %p143
    %s146 = sadd.s32 %s145, 1
    %p149 = scmp.eq.s32.totalorder %s17, 1
    %p150 = scmp.ne.s32.totalorder %s145, %s147
    %p151 = scmp.eq.s32.totalorder %s17, 0
    %p152 = por %p150, %p151
    %p153 = scmp.ne.s32.totalorder %s145, %s147
    %p154 = scmp.eq.s32.totalorder %s22, 1
    %p155 = por %p153, %p154
    %p156 = scmp.ne.s32.totalorder %s147, %s148
    %p157 = scmp.eq.s32.totalorder %s22, 0
    %p158 = por %p156, %p157
    %p159 = scmp.ne.s32.totalorder %s147, %s148
    %p160 = scmp.eq.s32.totalorder %s23, 1
    %p161 = por %p159, %p160
    %p163 = scmp.ne.s32.totalorder %s148, %s162
    %p164 = scmp.eq.s32.totalorder %s23, 0
    %p165 = por %p163, %p164
    %s167 = sadd.s32 %s166, 1
    %p170 = scmp.eq.s32.totalorder %s17, 1
    %p171 = scmp.ne.s32.totalorder %s166, %s168
    %p172 = scmp.eq.s32.totalorder %s17, 0
    %p173 = por %p171, %p172
    %p174 = scmp.ne.s32.totalorder %s166, %s168
    %p175 = scmp.eq.s32.totalorder %s22, 1
    %p176 = por %p174, %p175
    %p177 = scmp.ne.s32.totalorder %s168, %s169
    %p178 = scmp.eq.s32.totalorder %s22, 0
    %p179 = por %p177, %p178
    %p180 = scmp.ne.s32.totalorder %s168, %s169
    %p181 = scmp.eq.s32.totalorder %s23, 1
    %p182 = por %p180, %p181
    %p184 = scmp.ne.s32.totalorder %s169, %s183
    %p185 = scmp.eq.s32.totalorder %s23, 0
    %p186 = por %p184, %p185
    %s188 = sadd.s32 %s187, 1
    %p191 = scmp.eq.s32.totalorder %s17, 1
    %p192 = scmp.ne.s32.totalorder %s187, %s189
    %p193 = scmp.eq.s32.totalorder %s17, 0
    %p194 = por %p192, %p193
    %p195 = scmp.ne.s32.totalorder %s187, %s189
    %p196 = scmp.eq.s32.totalorder %s22, 1
    %p197 = por %p195, %p196
    %p198 = scmp.ne.s32.totalorder %s189, %s190
    %p199 = scmp.eq.s32.totalorder %s22, 0
    %p200 = por %p198, %p199
    %p201 = scmp.ne.s32.totalorder %s189, %s190
    %p202 = scmp.eq.s32.totalorder %s23, 1
    %p203 = por %p201, %p202
    %p205 = scmp.ne.s32.totalorder %s190, %s204
    %p206 = scmp.eq.s32.totalorder %s23, 0
    %p207 = por %p205, %p206
    %s208 = ssub.s32 %s24, %s36
    %p209 = scmp.eq.s32.totalorder %s208, 0
    %s211 = sadd.s32 %s210, 1
    %s212 = scalar_select %p209, %s210, %s211
    %p215 = pneg %p209
    %p216 = scmp.eq.s32.totalorder %s17, 1
    %p217 = por %p215, %p216
    %p218 = scmp.ne.s32.totalorder %s210, %s213
    %p219 = scmp.eq.s32.totalorder %s17, 0
    %p220 = por %p218, %p219
    %p221 = scmp.ne.s32.totalorder %s210, %s213
    %p222 = scmp.eq.s32.totalorder %s22, 1
    %p223 = por %p221, %p222
    %p224 = scmp.ne.s32.totalorder %s213, %s214
    %p225 = scmp.eq.s32.totalorder %s22, 0
    %p226 = por %p224, %p225
    %p227 = scmp.ne.s32.totalorder %s213, %s214
    %p228 = scmp.eq.s32.totalorder %s23, 1
    %p229 = por %p227, %p228
    %p231 = scmp.ne.s32.totalorder %s214, %s230
    %p232 = scmp.eq.s32.totalorder %s23, 0
    %p233 = por %p231, %p232
    %s234 = ssub.s32 %s24, %s36
    %p235 = scmp.eq.s32.totalorder %s234, 0
    %s237 = sadd.s32 %s236, 1
    %s238 = scalar_select %p235, %s236, %s237
    %p241 = pneg %p235
    %p242 = scmp.eq.s32.totalorder %s17, 1
    %p243 = por %p241, %p242
    %p244 = scmp.ne.s32.totalorder %s236, %s239
    %p245 = scmp.eq.s32.totalorder %s17, 0
    %p246 = por %p244, %p245
    %p247 = scmp.ne.s32.totalorder %s236, %s239
    %p248 = scmp.eq.s32.totalorder %s22, 1
    %p249 = por %p247, %p248
    %p250 = scmp.ne.s32.totalorder %s239, %s240
    %p251 = scmp.eq.s32.totalorder %s22, 0
    %p252 = por %p250, %p251
    %p253 = scmp.ne.s32.totalorder %s239, %s240
    %p254 = scmp.eq.s32.totalorder %s23, 1
    %p255 = por %p253, %p254
    %p257 = scmp.ne.s32.totalorder %s240, %s256
    %p258 = scmp.eq.s32.totalorder %s23, 0
    %p259 = por %p257, %p258
    %s260 = ssub.s32 %s24, %s36
    %s261 = ssub.s32 %s25, %s32
    %s262 = sor.u32 %s260, %s261
    %p263 = scmp.eq.s32.totalorder %s262, 0
    %s265 = sadd.s32 %s264, 1
    %s266 = scalar_select %p263, %s264, %s265
    %p269 = pneg %p263
    %p270 = scmp.eq.s32.totalorder %s17, 1
    %p271 = por %p269, %p270
    %p272 = scmp.ne.s32.totalorder %s264, %s267
    %p273 = scmp.eq.s32.totalorder %s17, 0
    %p274 = por %p272, %p273
    %p275 = scmp.ne.s32.totalorder %s264, %s267
    %p276 = scmp.eq.s32.totalorder %s22, 1
    %p277 = por %p275, %p276
    %p278 = scmp.ne.s32.totalorder %s267, %s268
    %p279 = scmp.eq.s32.totalorder %s22, 0
    %p280 = por %p278, %p279
    %p281 = scmp.ne.s32.totalorder %s267, %s268
    %p282 = scmp.eq.s32.totalorder %s23, 1
    %p283 = por %p281, %p282
    %p285 = scmp.ne.s32.totalorder %s268, %s284
    %p286 = scmp.eq.s32.totalorder %s23, 0
    %p287 = por %p285, %p286
    %s288 = ssub.s32 %s24, %s36
    %s289 = ssub.s32 %s25, %s32
    %s290 = sor.u32 %s288, %s289
    %p291 = scmp.eq.s32.totalorder %s290, 0
    %s293 = sadd.s32 %s292, 1
    %s294 = scalar_select %p291, %s292, %s293
    %p297 = pneg %p291
    %p298 = scmp.eq.s32.totalorder %s17, 1
    %p299 = por %p297, %p298
    %p300 = scmp.ne.s32.totalorder %s292, %s295
    %p301 = scmp.eq.s32.totalorder %s17, 0
    %p302 = por %p300, %p301
    %p303 = scmp.ne.s32.totalorder %s292, %s295
    %p304 = scmp.eq.s32.totalorder %s22, 1
    %p305 = por %p303, %p304
    %p306 = scmp.ne.s32.totalorder %s295, %s296
    %p307 = scmp.eq.s32.totalorder %s22, 0
    %p308 = por %p306, %p307
    %p309 = scmp.ne.s32.totalorder %s295, %s296
    %p310 = scmp.eq.s32.totalorder %s23, 1
    %p311 = por %p309, %p310
    %p313 = scmp.ne.s32.totalorder %s296, %s312
    %p314 = scmp.eq.s32.totalorder %s23, 0
    %p315 = por %p313, %p314
    %p316 = scmp.le.s32.totalorder 1, %s17
    %p317 = scmp.lt.s32.totalorder %s17, 3
    %p318 = pnand %p316, %p317
    %p319 = pneg %p318
    // Predicated region
    $region9: #{fuse12_frm_pallas.1} parent=5 // pred_check
      _
    $region10: #{fuse12_frm_pallas.1} parent=5 // pred_check_branch
      %321 = sbr.rel (%p318) target = $region12
    $region11: #{fuse12_frm_pallas.1} parent=5 // pred_region
      %s322 = ssub.s32 %s17, 1
      // Predicated region
      $region13: #{fuse12_frm_pallas.1} parent=11 // pred_check
        %p323 = pneg %p158
      $region14: #{fuse12_frm_pallas.1} parent=11 // pred_check_branch
        %325 = sbr.rel (%p323) target = $region16
      $region15: #{fuse12_frm_pallas.1} parent=11 // pred_region
        _
      $region16: #{fuse12_frm_pallas.1} parent=11 // pred_fallthru
        _
      // Predicated region
      $region17: #{fuse12_frm_pallas.1} parent=11 // pred_check
        %p326 = pneg %p179
      $region18: #{fuse12_frm_pallas.1} parent=11 // pred_check_branch
        %328 = sbr.rel (%p326) target = $region20
      $region19: #{fuse12_frm_pallas.1} parent=11 // pred_region
        _
      $region20: #{fuse12_frm_pallas.1} parent=11 // pred_fallthru
        _
      // Predicated region
      $region21: #{fuse12_frm_pallas.1} parent=11 // pred_check
        %p329 = pneg %p200
      $region22: #{fuse12_frm_pallas.1} parent=11 // pred_check_branch
        %331 = sbr.rel (%p329) target = $region24
      $region23: #{fuse12_frm_pallas.1} parent=11 // pred_region
        _
      $region24: #{fuse12_frm_pallas.1} parent=11 // pred_fallthru
        _
    $region12: #{fuse12_frm_pallas.1} parent=5 // pred_fallthru
      _
    %p332 = scmp.lt.s32.totalorder %s17, 2
    // Predicated region
    $region25: #{fuse12_frm_pallas.1} parent=5 // pred_check
      %p333 = pneg %p332
    $region26: #{fuse12_frm_pallas.1} parent=5 // pred_check_branch
      %335 = sbr.rel (%p333) target = $region28
    $region27: #{fuse12_frm_pallas.1} parent=5 // pred_region
      // Predicated region
      $region29: #{fuse12_frm_pallas.1} parent=27 // pred_check
        %p336 = pneg %p51
      $region30: #{fuse12_frm_pallas.1} parent=27 // pred_check_branch
        %338 = sbr.rel (%p336) target = $region32
      $region31: #{fuse12_frm_pallas.1} parent=27 // pred_region
        %s339 = smul.u32 2, %s25
        %p340 = scmp.lt.s32.totalorder %s24, 1
        %s341 = scalar_select %p340, %s24, 1
        %p342 = scmp.lt.s32.totalorder %s339, 1
        %s343 = scalar_select %p342, %s339, 1
        %s344 = smul.addr %s341, 2
        %s345 = sadd.s32 %s343, %s344
        %s346 = smul.addr %s345, 8
        %s347 = scalar_lea.vmem %s0, %s346
        %s348 = smul.u32 2, %s25
      $region32: #{fuse12_frm_pallas.1} parent=27 // pred_fallthru
        _
      // Predicated region
      $region33: #{fuse12_frm_pallas.1} parent=27 // pred_check
        %p349 = pneg %p79
      $region34: #{fuse12_frm_pallas.1} parent=27 // pred_check_branch
        %351 = sbr.rel (%p349) target = $region36
      $region35: #{fuse12_frm_pallas.1} parent=27 // pred_region
        %s352 = smul.u32 2, %s25
        %p353 = scmp.lt.s32.totalorder %s24, 1
        %s354 = scalar_select %p353, %s24, 1
        %p355 = scmp.lt.s32.totalorder %s352, 1
        %s356 = scalar_select %p355, %s352, 1
        %s357 = smul.addr %s354, 2
        %s358 = sadd.s32 %s356, %s357
        %s359 = smul.addr %s358, 8
        %s360 = scalar_lea.vmem %s1, %s359
        %s361 = smul.u32 2, %s25
      $region36: #{fuse12_frm_pallas.1} parent=27 // pred_fallthru
        _
      // Predicated region
      $region37: #{fuse12_frm_pallas.1} parent=27 // pred_check
        %p362 = pneg %p105
      $region38: #{fuse12_frm_pallas.1} parent=27 // pred_check_branch
        %364 = sbr.rel (%p362) target = $region40
      $region39: #{fuse12_frm_pallas.1} parent=27 // pred_region
        %p365 = scmp.lt.s32.totalorder %s24, 1
        %s366 = scalar_select %p365, %s24, 1
        %s367 = smul.addr %s366, 8
        %s368 = scalar_lea.vmem %s2, %s367
      $region40: #{fuse12_frm_pallas.1} parent=27 // pred_fallthru
        _
      // Predicated region
      $region41: #{fuse12_frm_pallas.1} parent=27 // pred_check
        %p369 = pneg %p131
      $region42: #{fuse12_frm_pallas.1} parent=27 // pred_check_branch
        %371 = sbr.rel (%p369) target = $region44
      $region43: #{fuse12_frm_pallas.1} parent=27 // pred_region
        %p372 = scmp.lt.s32.totalorder %s24, 1
        %s373 = scalar_select %p372, %s24, 1
        %s374 = smul.addr %s373, 8
        %s375 = scalar_lea.vmem %s3, %s374
      $region44: #{fuse12_frm_pallas.1} parent=27 // pred_fallthru
        _
      // Predicated region
      $region45: #{fuse12_frm_pallas.1} parent=27 // pred_check
        %p376 = pneg %p220
      $region46: #{fuse12_frm_pallas.1} parent=27 // pred_check_branch
        %378 = sbr.rel (%p376) target = $region48
      $region47: #{fuse12_frm_pallas.1} parent=27 // pred_region
        %p379 = scmp.lt.s32.totalorder %s24, 1
        %s380 = scalar_select %p379, %s24, 1
        %s381 = smul.addr %s380, 8
        %s382 = scalar_lea.vmem %s7, %s381
      $region48: #{fuse12_frm_pallas.1} parent=27 // pred_fallthru
        _
      // Predicated region
      $region49: #{fuse12_frm_pallas.1} parent=27 // pred_check
        %p383 = pneg %p246
      $region50: #{fuse12_frm_pallas.1} parent=27 // pred_check_branch
        %385 = sbr.rel (%p383) target = $region52
      $region51: #{fuse12_frm_pallas.1} parent=27 // pred_region
        %p386 = scmp.lt.s32.totalorder %s24, 1
        %s387 = scalar_select %p386, %s24, 1
        %s388 = smul.addr %s387, 8
        %s389 = scalar_lea.vmem %s8, %s388
      $region52: #{fuse12_frm_pallas.1} parent=27 // pred_fallthru
        _
    $region28: #{fuse12_frm_pallas.1} parent=5 // pred_fallthru
      _
    %p390 = scmp.le.s32.totalorder 1, %s17
    %p391 = scmp.lt.s32.totalorder %s17, 3
    %p392 = pnand %p390, %p391
    %p393 = pneg %p392
    // Predicated region
    $region53: #{fuse12_frm_pallas.1} parent=5 // pred_check
      _
    $region54: #{fuse12_frm_pallas.1} parent=5 // pred_check_branch
      %395 = sbr.rel (%p392) target = $region56
    $region55: #{fuse12_frm_pallas.1} parent=5 // pred_region
      %s396 = ssub.s32 %s17, 1
      %s397 = smul.u32 2, %s27
      %p398 = scmp.lt.s32.totalorder %s26, 1
      %s399 = scalar_select %p398, %s26, 1
      %p400 = scmp.lt.s32.totalorder %s397, 1
      %s401 = scalar_select %p400, %s397, 1
      %s402 = smul.addr %s399, 2
      %s403 = sadd.s32 %s401, %s402
      %s404 = smul.addr %s403, 8
      %s405 = scalar_lea.vmem %s0, %s404
      %p406 = pneg %p57
      %p407 = pneg %p54
      %s408 = smul.u32 2, %s27
      %p409 = scmp.lt.s32.totalorder %s26, 1
      %s410 = scalar_select %p409, %s26, 1
      %p411 = scmp.lt.s32.totalorder %s408, 1
      %s412 = scalar_select %p411, %s408, 1
      %s413 = smul.addr %s410, 2
      %s414 = sadd.s32 %s412, %s413
      %s415 = smul.addr %s414, 8
      %s416 = scalar_lea.vmem %s1, %s415
      %p417 = pneg %p85
      %p418 = pneg %p82
      %p419 = scmp.lt.s32.totalorder %s26, 1
      %s420 = scalar_select %p419, %s26, 1
      %s421 = smul.addr %s420, 8
      %s422 = scalar_lea.vmem %s2, %s421
      %p423 = pneg %p111
      %p424 = pneg %p108
      %p425 = scmp.lt.s32.totalorder %s26, 1
      %s426 = scalar_select %p425, %s26, 1
      %s427 = smul.addr %s426, 8
      %s428 = scalar_lea.vmem %s3, %s427
      %p429 = pneg %p137
      %p430 = pneg %p134
      %p431 = pneg %p158
      %p432 = pneg %p155
      %p433 = pneg %p179
      %p434 = pneg %p176
      %p435 = pneg %p200
      %p436 = pneg %p197
      %p437 = scmp.lt.s32.totalorder %s26, 1
      %s438 = scalar_select %p437, %s26, 1
      %s439 = smul.addr %s438, 8
      %s440 = scalar_lea.vmem %s7, %s439
      %p441 = pneg %p226
      %p442 = pneg %p223
      %p443 = scmp.lt.s32.totalorder %s26, 1
      %s444 = scalar_select %p443, %s26, 1
      %s445 = smul.addr %s444, 8
      %s446 = scalar_lea.vmem %s8, %s445
      %p447 = pneg %p252
      %p448 = pneg %p249
      %p449 = pneg %p280
      %p450 = pneg %p277
      %s451 = smul.u32 2, %s27
      %p452 = scmp.lt.s32.totalorder %s26, 1
      %s453 = scalar_select %p452, %s26, 1
      %p454 = scmp.lt.s32.totalorder %s451, 1
      %s455 = scalar_select %p454, %s451, 1
      %s456 = smul.addr %s453, 2
      %s457 = sadd.s32 %s455, %s456
      %s458 = smul.addr %s457, 8
      %s459 = scalar_lea.vmem %s9, %s458
      %p460 = pneg %p308
      %p461 = pneg %p305
      %s462 = smul.u32 2, %s27
      %p463 = scmp.lt.s32.totalorder %s26, 1
      %s464 = scalar_select %p463, %s26, 1
      %p465 = scmp.lt.s32.totalorder %s462, 1
      %s466 = scalar_select %p465, %s462, 1
      %s467 = smul.addr %s464, 2
      %s468 = sadd.s32 %s466, %s467
      %s469 = smul.addr %s468, 8
      %s470 = scalar_lea.vmem %s10, %s469
      %s471 = smul.u32 2, %s27
      %p472 = scmp.lt.s32.totalorder %s26, 1
      %s473 = scalar_select %p472, %s26, 1
      %p474 = scmp.lt.s32.totalorder %s471, 1
      %s475 = scalar_select %p474, %s471, 1
      %s476 = smul.addr %s473, 2
      %s477 = sadd.s32 %s475, %s476
      %s478 = smul.addr %s477, 8
      %s479 = scalar_lea.vmem %s0, %s478
      %s480 = smul.u32 2, %s27
      %s481 = smul.u32 2, %s27
      %p482 = scmp.lt.s32.totalorder %s26, 1
      %s483 = scalar_select %p482, %s26, 1
      %p484 = scmp.lt.s32.totalorder %s481, 1
      %s485 = scalar_select %p484, %s481, 1
      %s486 = smul.addr %s483, 2
      %s487 = sadd.s32 %s485, %s486
      %s488 = smul.addr %s487, 8
      %s489 = scalar_lea.vmem %s1, %s488
      %s490 = smul.u32 2, %s27
      %p491 = scmp.lt.s32.totalorder %s26, 1
      %s492 = scalar_select %p491, %s26, 1
      %s493 = smul.addr %s492, 8
      %s494 = scalar_lea.vmem %s2, %s493
      %p495 = scmp.lt.s32.totalorder %s26, 1
      %s496 = scalar_select %p495, %s26, 1
      %s497 = smul.addr %s496, 8
      %s498 = scalar_lea.vmem %s3, %s497
      %p499 = scmp.lt.s32.totalorder %s26, 1
      %s500 = scalar_select %p499, %s26, 1
      %s501 = smul.addr %s500, 8
      %s502 = scalar_lea.vmem %s7, %s501
      %p503 = scmp.lt.s32.totalorder %s26, 1
      %s504 = scalar_select %p503, %s26, 1
      %s505 = smul.addr %s504, 8
      %s506 = scalar_lea.vmem %s8, %s505
      %s507 = smul.u32 2, %s27
      %p508 = scmp.lt.s32.totalorder %s26, 1
      %s509 = scalar_select %p508, %s26, 1
      %p510 = scmp.lt.s32.totalorder %s507, 1
      %s511 = scalar_select %p510, %s507, 1
      %s512 = smul.addr %s509, 2
      %s513 = sadd.s32 %s511, %s512
      %s514 = smul.addr %s513, 8
      %s515 = scalar_lea.vmem %s9, %s514
      %s516 = smul.u32 2, %s27
      %s517 = smul.u32 2, %s27
      %p518 = scmp.lt.s32.totalorder %s26, 1
      %s519 = scalar_select %p518, %s26, 1
      %p520 = scmp.lt.s32.totalorder %s517, 1
      %s521 = scalar_select %p520, %s517, 1
      %s522 = smul.addr %s519, 2
      %s523 = sadd.s32 %s521, %s522
      %s524 = smul.addr %s523, 8
      %s525 = scalar_lea.vmem %s10, %s524
      %s526 = smul.u32 2, %s27
      %v527 = vld [vmem:[%s479] sm:$0xff]
      %v528 = vld [vmem:[%s479 + $0x8] sm:$0xff]
      %v529 = vld [vmem:[%s489] sm:$0xff]
      %v530 = vld [vmem:[%s489 + $0x8] sm:$0xff]
      %v531 = vld [vmem:[%s494] sm:$0xff]
      %v532 = vld [vmem:[%s498] sm:$0xff]
      %vm533 = vcmask 64512
      %v535 = vsel %vm533, %v532, 0
      %537 = vmatprep.subr.mxu0 %v530
      %538 = vmatpush1.msra.mxu0 %v529
      %539 = vmatprep.subr.mxu0 0.0
      %540 = vmatpush1.msra.mxu0 0.0
      %541 = vmatprep.subr.mxu0 0.0
      %542 = vmatpush1.msra.mxu0 0.0
      %543 = vmatprep.subr.mxu0 0.0
      %544 = vmatpush1.msra.mxu0 0.0
      %545 = vmatprep.subr.mxu0 0.0
      %546 = vmatpush1.msra.mxu0 0.0
      %547 = vmatprep.subr.mxu0 0.0
      %548 = vmatpush1.msra.mxu0 0.0
      %549 = vmatprep.subr.mxu0 0.0
      %550 = vmatpush1.msra.mxu0 0.0
      %551 = vmatprep.subr.mxu0 0.0
      %552 = vmatpush1.msra.mxu0 0.0
      %553 = vmatprep.subr.mxu0 0.0
      %554 = vmatpush1.msra.mxu0 0.0
      %555 = vmatprep.subr.mxu0 0.0
      %556 = vmatpush1.msra.mxu0 0.0
      %557 = vmatprep.subr.mxu0 0.0
      %558 = vmatpush1.msra.mxu0 0.0
      %559 = vmatprep.subr.mxu0 0.0
      %560 = vmatpush1.msra.mxu0 0.0
      %561 = vmatprep.subr.mxu0 0.0
      %562 = vmatpush1.msra.mxu0 0.0
      %563 = vmatprep.subr.mxu0 0.0
      %564 = vmatpush1.msra.mxu0 0.0
      %565 = vmatprep.subr.mxu0 0.0
      %566 = vmatpush1.msra.mxu0 0.0
      %567 = vmatprep.subr.mxu0 0.0
      %568 = vmatpush1.msra.mxu0 0.0
      %569 = vmatprep.subr.mxu0 0.0
      %570 = vmatpush1.msra.mxu0 0.0
      %571 = vmatprep.subr.mxu0 0.0
      %572 = vmatpush1.msra.mxu0 0.0
      %573 = vmatprep.subr.mxu0 0.0
      %574 = vmatpush1.msra.mxu0 0.0
      %575 = vmatprep.subr.mxu0 0.0
      %576 = vmatpush1.msra.mxu0 0.0
      %577 = vmatprep.subr.mxu0 0.0
      %578 = vmatpush1.msra.mxu0 0.0
      %579 = vmatprep.subr.mxu0 0.0
      %580 = vmatpush1.msra.mxu0 0.0
      %581 = vmatprep.subr.mxu0 0.0
      %582 = vmatpush1.msra.mxu0 0.0
      %583 = vmatprep.subr.mxu0 0.0
      %584 = vmatpush1.msra.mxu0 0.0
      %585 = vmatprep.subr.mxu0 0.0
      %586 = vmatpush1.msra.mxu0 0.0
      %587 = vmatprep.subr.mxu0 0.0
      %588 = vmatpush1.msra.mxu0 0.0
      %589 = vmatprep.subr.mxu0 0.0
      %590 = vmatpush1.msra.mxu0 0.0
      %591 = vmatprep.subr.mxu0 0.0
      %592 = vmatpush1.msra.mxu0 0.0
      %593 = vmatprep.subr.mxu0 0.0
      %594 = vmatpush1.msra.mxu0 0.0
      %595 = vmatprep.subr.mxu0 0.0
      %596 = vmatpush1.msra.mxu0 0.0
      %597 = vmatprep.subr.mxu0 0.0
      %598 = vmatpush1.msra.mxu0 0.0
      %599 = vmatprep.subr.mxu0 0.0
      %600 = vmatpush1.msra.mxu0 0.0
      %601 = vmatprep.mubr.f32.mxu0 0.0
      %602 = vmatmul.mubr.f32.gmra.mrb[0].mxu0 %v535
      %v603 = vpop.f32.mrb[0].mxu0
      %v604 = vadd.f32 0.0, %v603
      %v605 = vpop.f32.mrb[0].mxu0
      %v606 = vadd.f32 0.0, %v605
      %607 = vdwg.mxu0
      %v609 = vsel %vm533, %v531, 0
      %611 = vmatprep.subr.mxu0 %v528
      %612 = vmatpush1.msra.mxu0 %v527
      %613 = vmatprep.subr.mxu0 0.0
      %614 = vmatpush1.msra.mxu0 0.0
      %615 = vmatprep.subr.mxu0 0.0
      %616 = vmatpush1.msra.mxu0 0.0
      %617 = vmatprep.subr.mxu0 0.0
      %618 = vmatpush1.msra.mxu0 0.0
      %619 = vmatprep.subr.mxu0 0.0
      %620 = vmatpush1.msra.mxu0 0.0
      %621 = vmatprep.subr.mxu0 0.0
      %622 = vmatpush1.msra.mxu0 0.0
      %623 = vmatprep.subr.mxu0 0.0
      %624 = vmatpush1.msra.mxu0 0.0
      %625 = vmatprep.subr.mxu0 0.0
      %626 = vmatpush1.msra.mxu0 0.0
      %627 = vmatprep.subr.mxu0 0.0
      %628 = vmatpush1.msra.mxu0 0.0
      %629 = vmatprep.subr.mxu0 0.0
      %630 = vmatpush1.msra.mxu0 0.0
      %631 = vmatprep.subr.mxu0 0.0
      %632 = vmatpush1.msra.mxu0 0.0
      %633 = vmatprep.subr.mxu0 0.0
      %634 = vmatpush1.msra.mxu0 0.0
      %635 = vmatprep.subr.mxu0 0.0
      %636 = vmatpush1.msra.mxu0 0.0
      %637 = vmatprep.subr.mxu0 0.0
      %638 = vmatpush1.msra.mxu0 0.0
      %639 = vmatprep.subr.mxu0 0.0
      %640 = vmatpush1.msra.mxu0 0.0
      %641 = vmatprep.subr.mxu0 0.0
      %642 = vmatpush1.msra.mxu0 0.0
      %643 = vmatprep.subr.mxu0 0.0
      %644 = vmatpush1.msra.mxu0 0.0
      %645 = vmatprep.subr.mxu0 0.0
      %646 = vmatpush1.msra.mxu0 0.0
      %647 = vmatprep.subr.mxu0 0.0
      %648 = vmatpush1.msra.mxu0 0.0
      %649 = vmatprep.subr.mxu0 0.0
      %650 = vmatpush1.msra.mxu0 0.0
      %651 = vmatprep.subr.mxu0 0.0
      %652 = vmatpush1.msra.mxu0 0.0
      %653 = vmatprep.subr.mxu0 0.0
      %654 = vmatpush1.msra.mxu0 0.0
      %655 = vmatprep.subr.mxu0 0.0
      %656 = vmatpush1.msra.mxu0 0.0
      %657 = vmatprep.subr.mxu0 0.0
      %658 = vmatpush1.msra.mxu0 0.0
      %659 = vmatprep.subr.mxu0 0.0
      %660 = vmatpush1.msra.mxu0 0.0
      %661 = vmatprep.subr.mxu0 0.0
      %662 = vmatpush1.msra.mxu0 0.0
      %663 = vmatprep.subr.mxu0 0.0
      %664 = vmatpush1.msra.mxu0 0.0
      %665 = vmatprep.subr.mxu0 0.0
      %666 = vmatpush1.msra.mxu0 0.0
      %667 = vmatprep.subr.mxu0 0.0
      %668 = vmatpush1.msra.mxu0 0.0
      %669 = vmatprep.subr.mxu0 0.0
      %670 = vmatpush1.msra.mxu0 0.0
      %671 = vmatprep.subr.mxu0 0.0
      %672 = vmatpush1.msra.mxu0 0.0
      %673 = vmatprep.subr.mxu0 0.0
      %674 = vmatpush1.msra.mxu0 0.0
      %675 = vmatprep.mubr.f32.mxu0 0.0
      %676 = vmatmul.mubr.f32.gmra.mrb[0].mxu0 %v609
      %v677 = vpop.f32.mrb[0].mxu0
      %v678 = vadd.f32 %v604, %v677
      %v679 = vpop.f32.mrb[0].mxu0
      %v680 = vadd.f32 %v606, %v679
      %681 = vdwg.mxu0
      %v682 = vld [vmem:[%s4] sm:$0xff]
      %684 = vset.pattern.permute.xlu0 0
      %685 = vperm.xlu0 %684, %v682
      %v686 = vpop.permute.xlu0 %685
      %v688 = vadd.f32 %v678, %v686
      %v689 = vadd.f32 %v680, %v686
      %v690 = vmax.f32 %v688, 0.0
      %v691 = vmax.f32 %v689, 0.0
      %v692 = vld [vmem:[%s5] sm:$0x3]
      %v693 = vld [vmem:[%s6] sm:$0x3]
      %695 = vset.pattern.permute.xlu0 0
      %696 = vperm.xlu0 %695, %v693
      %v697 = vpop.permute.xlu0 %696
      %v700 = vsel %vm533, %v692, 0
      %702 = vmatprep.subr.mxu0 %v691
      %703 = vmatpush1.msra.mxu0 %v690
      %704 = vmatprep.subr.mxu0 0.0
      %705 = vmatpush1.msra.mxu0 0.0
      %706 = vmatprep.subr.mxu0 0.0
      %707 = vmatpush1.msra.mxu0 0.0
      %708 = vmatprep.subr.mxu0 0.0
      %709 = vmatpush1.msra.mxu0 0.0
      %710 = vmatprep.subr.mxu0 0.0
      %711 = vmatpush1.msra.mxu0 0.0
      %712 = vmatprep.subr.mxu0 0.0
      %713 = vmatpush1.msra.mxu0 0.0
      %714 = vmatprep.subr.mxu0 0.0
      %715 = vmatpush1.msra.mxu0 0.0
      %716 = vmatprep.subr.mxu0 0.0
      %717 = vmatpush1.msra.mxu0 0.0
      %718 = vmatprep.subr.mxu0 0.0
      %719 = vmatpush1.msra.mxu0 0.0
      %720 = vmatprep.subr.mxu0 0.0
      %721 = vmatpush1.msra.mxu0 0.0
      %722 = vmatprep.subr.mxu0 0.0
      %723 = vmatpush1.msra.mxu0 0.0
      %724 = vmatprep.subr.mxu0 0.0
      %725 = vmatpush1.msra.mxu0 0.0
      %726 = vmatprep.subr.mxu0 0.0
      %727 = vmatpush1.msra.mxu0 0.0
      %728 = vmatprep.subr.mxu0 0.0
      %729 = vmatpush1.msra.mxu0 0.0
      %730 = vmatprep.subr.mxu0 0.0
      %731 = vmatpush1.msra.mxu0 0.0
      %732 = vmatprep.subr.mxu0 0.0
      %733 = vmatpush1.msra.mxu0 0.0
      %734 = vmatprep.subr.mxu0 0.0
      %735 = vmatpush1.msra.mxu0 0.0
      %736 = vmatprep.subr.mxu0 0.0
      %737 = vmatpush1.msra.mxu0 0.0
      %738 = vmatprep.subr.mxu0 0.0
      %739 = vmatpush1.msra.mxu0 0.0
      %740 = vmatprep.subr.mxu0 0.0
      %741 = vmatpush1.msra.mxu0 0.0
      %742 = vmatprep.subr.mxu0 0.0
      %743 = vmatpush1.msra.mxu0 0.0
      %744 = vmatprep.subr.mxu0 0.0
      %745 = vmatpush1.msra.mxu0 0.0
      %746 = vmatprep.subr.mxu0 0.0
      %747 = vmatpush1.msra.mxu0 0.0
      %748 = vmatprep.subr.mxu0 0.0
      %749 = vmatpush1.msra.mxu0 0.0
      %750 = vmatprep.subr.mxu0 0.0
      %751 = vmatpush1.msra.mxu0 0.0
      %752 = vmatprep.subr.mxu0 0.0
      %753 = vmatpush1.msra.mxu0 0.0
      %754 = vmatprep.subr.mxu0 0.0
      %755 = vmatpush1.msra.mxu0 0.0
      %756 = vmatprep.subr.mxu0 0.0
      %757 = vmatpush1.msra.mxu0 0.0
      %758 = vmatprep.subr.mxu0 0.0
      %759 = vmatpush1.msra.mxu0 0.0
      %760 = vmatprep.subr.mxu0 0.0
      %761 = vmatpush1.msra.mxu0 0.0
      %762 = vmatprep.subr.mxu0 0.0
      %763 = vmatpush1.msra.mxu0 0.0
      %764 = vmatprep.subr.mxu0 0.0
      %765 = vmatpush1.msra.mxu0 0.0
      %766 = vmatprep.mubr.f32.mxu0 0.0
      %767 = vmatmul.mubr.f32.gmra.mrb[0].mxu0 %v700
      %v768 = vpop.f32.mrb[0].mxu0
      %v769 = vadd.f32 %v697, %v768
      %v770 = vpop.f32.mrb[0].mxu0
      %v771 = vadd.f32 %v697, %v770
      %772 = vdwg.mxu0
      %v773 = vxor.u32 %v769, 2147483648
      %v774 = vxor.u32 %v771, 2147483648
      %v775 = vmul.f32 %v773, 1.442695
      %v776 = vpow.pop %v775
      %v777 = vmul.f32 %v774, 1.442695
      %v778 = vpow.pop %v777
      %v779 = vadd.f32 %v776, 1.0
      %v780 = vadd.f32 %v778, 1.0
      %v781 = vrcp.pop %v779
      %v782 = vmul.f32 1.0, %v781
      %v783 = vrcp.pop %v780
      %v784 = vmul.f32 1.0, %v783
      %v785 = vld [vmem:[%s502] sm:$0xff]
      %v786 = vld [vmem:[%s506] sm:$0xff]
      %v787 = vadd.f32 %v782, 1.0
      %v788 = vadd.f32 %v784, 1.0
      %790 = vset.pattern.permute.xlu0 0
      %791 = vperm.xlu0 %790, %v785
      %v792 = vpop.permute.xlu0 %791
      %v794 = vlaneseq
      %v795 = vshrl.u32 %v794, 7
      %v796 = vsub.s32 0, %v795
      %v797 = vrot.slane %v787, %v796
      %v798 = vlaneseq
      %v799 = vshrl.u32 %v798, 7
      %v800 = vsub.s32 0, %v799
      %v801 = vrot.slane %v788, %v800
      %v802 = vmul.f32 %v792, %v797
      %v803 = vmul.f32 %v792, %v801
      %v804 = vadd.f32 %v802, 1.0
      %v805 = vadd.f32 %v803, 1.0
      %v806 = vmul.f32 %v527, %v804
      %v807 = vmul.f32 %v528, %v805
      %808 = vst [vmem:[%s515] sm:$0xff] %v806
      %809 = vst [vmem:[%s515 + $0x8] sm:$0xff] %v807
      %811 = vset.pattern.permute.xlu0 0
      %812 = vperm.xlu0 %811, %v786
      %v813 = vpop.permute.xlu0 %812
      %v815 = vlaneseq
      %v816 = vshrl.u32 %v815, 7
      %v817 = vsub.s32 1, %v816
      %v818 = vrot.slane %v787, %v817
      %v819 = vlaneseq
      %v820 = vshrl.u32 %v819, 7
      %v821 = vsub.s32 1, %v820
      %v822 = vrot.slane %v788, %v821
      %v823 = vmul.f32 %v813, %v818
      %v824 = vmul.f32 %v813, %v822
      %v825 = vadd.f32 %v823, 1.0
      %v826 = vadd.f32 %v824, 1.0
      %v827 = vmul.f32 %v529, %v825
      %v828 = vmul.f32 %v530, %v826
      %829 = vst [vmem:[%s525] sm:$0xff] %v827
      %830 = vst [vmem:[%s525 + $0x8] sm:$0xff] %v828
      %s831 = smul.u32 2, %s27
      %p832 = scmp.lt.s32.totalorder %s26, 1
      %s833 = scalar_select %p832, %s26, 1
      %p834 = scmp.lt.s32.totalorder %s831, 1
      %s835 = scalar_select %p834, %s831, 1
      %s836 = smul.addr %s833, 2
      %s837 = sadd.s32 %s835, %s836
      %s838 = smul.addr %s837, 8
      %s839 = scalar_lea.vmem %s9, %s838
      %s840 = smul.u32 2, %s27
      %p841 = scmp.lt.s32.totalorder %s26, 1
      %s842 = scalar_select %p841, %s26, 1
      %p843 = scmp.lt.s32.totalorder %s840, 1
      %s844 = scalar_select %p843, %s840, 1
      %s845 = smul.addr %s842, 2
      %s846 = sadd.s32 %s844, %s845
      %s847 = smul.addr %s846, 8
      %s848 = scalar_lea.vmem %s10, %s847
      // Predicated region
      $region57: #{fuse12_frm_pallas.1} parent=55 // pred_check
        %p849 = pneg %p277
      $region58: #{fuse12_frm_pallas.1} parent=55 // pred_check_branch
        %851 = sbr.rel (%p849) target = $region60
      $region59: #{fuse12_frm_pallas.1} parent=55 // pred_region
        %s852 = smul.u32 2, %s27
      $region60: #{fuse12_frm_pallas.1} parent=55 // pred_fallthru
        _
      // Predicated region
      $region61: #{fuse12_frm_pallas.1} parent=55 // pred_check
        %p853 = pneg %p305
      $region62: #{fuse12_frm_pallas.1} parent=55 // pred_check_branch
        %855 = sbr.rel (%p853) target = $region64
      $region63: #{fuse12_frm_pallas.1} parent=55 // pred_region
        %s856 = smul.u32 2, %s27
      $region64: #{fuse12_frm_pallas.1} parent=55 // pred_fallthru
        _
    $region56: #{fuse12_frm_pallas.1} parent=5 // pred_fallthru
      _
    %p857 = scmp.le.s32.totalorder 2, %s17
    // Predicated region
    $region65: #{fuse12_frm_pallas.1} parent=5 // pred_check
      %p858 = pneg %p857
    $region66: #{fuse12_frm_pallas.1} parent=5 // pred_check_branch
      %860 = sbr.rel (%p858) target = $region68
    $region67: #{fuse12_frm_pallas.1} parent=5 // pred_region
      %s861 = ssub.s32 %s17, 2
      // Predicated region
      $region69: #{fuse12_frm_pallas.1} parent=67 // pred_check
        %p862 = pneg %p283
      $region70: #{fuse12_frm_pallas.1} parent=67 // pred_check_branch
        %864 = sbr.rel (%p862) target = $region72
      $region71: #{fuse12_frm_pallas.1} parent=67 // pred_region
        %s865 = smul.u32 2, %s29
        %p866 = scmp.lt.s32.totalorder %s28, 1
        %s867 = scalar_select %p866, %s28, 1
        %p868 = scmp.lt.s32.totalorder %s865, 1
        %s869 = scalar_select %p868, %s865, 1
        %s870 = smul.addr %s867, 2
        %s871 = sadd.s32 %s869, %s870
        %s872 = smul.addr %s871, 8
        %s873 = scalar_lea.vmem %s9, %s872
      $region72: #{fuse12_frm_pallas.1} parent=67 // pred_fallthru
        _
      // Predicated region
      $region73: #{fuse12_frm_pallas.1} parent=67 // pred_check
        %p874 = pneg %p311
      $region74: #{fuse12_frm_pallas.1} parent=67 // pred_check_branch
        %876 = sbr.rel (%p874) target = $region76
      $region75: #{fuse12_frm_pallas.1} parent=67 // pred_region
        %s877 = smul.u32 2, %s29
        %p878 = scmp.lt.s32.totalorder %s28, 1
        %s879 = scalar_select %p878, %s28, 1
        %p880 = scmp.lt.s32.totalorder %s877, 1
        %s881 = scalar_select %p880, %s877, 1
        %s882 = smul.addr %s879, 2
        %s883 = sadd.s32 %s881, %s882
        %s884 = smul.addr %s883, 8
        %s885 = scalar_lea.vmem %s10, %s884
      $region76: #{fuse12_frm_pallas.1} parent=67 // pred_fallthru
        _
    $region68: #{fuse12_frm_pallas.1} parent=5 // pred_fallthru
      _
  $region6: #{fuse12_frm_pallas.1} parent=0 // loop_footer
    %s21 = sadd.s32 1, %s17
  $region7: #{fuse12_frm_pallas.1} parent=0 // loop_footer_branch
    %16 = sbr.rel target = $region3
  $region8: #{fuse12_frm_pallas.1} parent=0 // loop_exit
    _

</llo_original>
